<compile_context>
chip_gen: v7x
topology: tpu7x:2x2x1
jax: 0.10.0
libtpu: 0.0.40
codegen_flags: <defaults>
</compile_context>

<pallas_src>
import numpy as np
import jax
import jax.numpy as jnp
from jax import lax
from jax.experimental import pallas as pl
from jax.experimental.pallas import tpu as pltpu


def bottleneck_kernel(x_ref, w1_ref, b1_ref, w2_ref, b2_ref, w3_ref, b3_ref,
                      o_ref):
    # x_ref block: (1, H,  W, Cin)  -- full unpadded image (resident across j)
    # o_ref block: (1, TH, W, Cout) -- one spatial row-tile of the output
    _, TH, W, Cout = o_ref.shape
    _, H, _, Cin = x_ref.shape
    Cmid = w1_ref.shape[1]
    THp = TH + 2

    j = pl.program_id(1)
    last = pl.num_programs(1) - 1
    row0 = j * TH

    # ---- tile rows + 1-row halo above/below (clamped loads; out-of-image
    #      halo rows are zeroed after conv1, matching SAME zero padding) ----
    x_c = x_ref[0, pl.ds(row0, TH), :, :]                    # (TH, W, Cin)
    t_idx = jnp.maximum(row0 - 1, 0)
    b_idx = jnp.minimum(row0 + TH, H - 1)
    x_t = x_ref[0, pl.ds(t_idx, 1), :, :]                    # (1, W, Cin)
    x_b = x_ref[0, pl.ds(b_idx, 1), :, :]                    # (1, W, Cin)
    x_win = jnp.concatenate([x_t, x_c, x_b], axis=0)         # (THp, W, Cin)
    cdt = x_win.dtype                                        # bf16 for MXU

    # ---- conv1 (1x1, BN-scale folded) + bias + relu over the halo window ----
    h1 = jnp.dot(x_win.reshape(THp * W, Cin), w1_ref[...],
                 preferred_element_type=jnp.float32)
    h1 = jnp.maximum(h1 + b1_ref[...], 0.0).reshape(THp, W, Cmid)

    # Zero only the (at most two) halo rows that fall outside the image.
    rid = lax.broadcasted_iota(jnp.int32, (THp, 1, 1), 0)
    row_ok = jnp.logical_and(jnp.logical_or(rid > 0, j > 0),
                             jnp.logical_or(rid < THp - 1, j < last))
    h1b = jnp.where(row_ok, h1, 0.0).astype(cdt)             # (THp, W, Cmid)

    # ---- conv2 (3x3, stride=1, SAME): column taps (dx = -1, 0, +1) built
    #      once, 3-way lane concat, then 3 accumulated K=3*Cmid matmuls with
    #      the ky taps taken as free outer-dim row slices. ----
    zcol = jnp.zeros((THp, 1, Cmid), cdt)
    left = jnp.concatenate([zcol, h1b[:, :W - 1, :]], axis=1)   # h1[y, x-1]
    right = jnp.concatenate([h1b[:, 1:, :], zcol], axis=1)      # h1[y, x+1]
    hcat = jnp.concatenate([left, h1b, right], axis=-1)         # (THp, W, 3*Cmid)

    acc = jnp.dot(hcat[0:TH].reshape(TH * W, 3 * Cmid), w2_ref[0],
                  preferred_element_type=jnp.float32)
    for ky in (1, 2):
        acc = acc + jnp.dot(hcat[ky:ky + TH].reshape(TH * W, 3 * Cmid),
                            w2_ref[ky], preferred_element_type=jnp.float32)
    h2 = jnp.maximum(acc + b2_ref[...], 0.0).astype(cdt)        # (TH*W, Cmid)

    # ---- conv3 (1x1, BN-scale folded) + bias ----
    h3 = jnp.dot(h2, w3_ref[...], preferred_element_type=jnp.float32)
    h3 = h3 + b3_ref[...]

    # ---- residual add (reuses the already-loaded tile rows) + relu ----
    ident = x_c.reshape(TH * W, Cin).astype(jnp.float32)
    out = jnp.maximum(h3 + ident, 0.0)
    o_ref[...] = out.reshape(1, TH, W, Cout).astype(o_ref.dtype)


def _step_vmem_bytes(TH, H, W, Cin, Cmid, Cout, act_bytes):
    """Rough per-grid-step VMEM working-set estimate (heuristic)."""
    THp = TH + 2
    return (H * W * Cin * act_bytes                   # resident input image
            + THp * W * Cin * act_bytes               # halo window copy
            + THp * W * Cmid * (4 + 4 * act_bytes)    # h1 (f32) + taps/concat
            + TH * W * Cmid * 4                       # conv2 accumulator
            + TH * W * (Cmid + Cout) * act_bytes
            + 2 * TH * W * Cout * act_bytes)          # double-buffered output


def _pick_tile_h(H, W, Cin, Cmid, Cout, act_bytes, budget_bytes=24 << 20):
    """Largest divisor of H whose per-step working set fits the VMEM budget."""
    best = 1
    for d in range(1, H + 1):
        if H % d == 0 and _step_vmem_bytes(d, H, W, Cin, Cmid, Cout,
                                           act_bytes) <= budget_bytes:
            best = d
    return best


def bottleneck_pallas(x_nhwc, params, *, tile_h=None, out_dtype=jnp.bfloat16,
                      vmem_limit_bytes=None):
    """Fused Bottleneck forward. x_nhwc: (N, H, W, Cin); params BN-folded."""
    w1, b1, w2, b2, w3, b3 = params
    N, H, W, Cin = x_nhwc.shape
    Cmid = w1.shape[1]
    Cout = w3.shape[1]
    # stride=1 / downsample=None => residual requires matching channels.
    assert Cin == Cout, "Bottleneck with downsample=None needs inplanes == planes*expansion"
    assert w2.shape == (3, 3 * Cmid, Cmid)

    act_bytes = jnp.dtype(x_nhwc.dtype).itemsize
    if tile_h is None:
        tile_h = _pick_tile_h(H, W, Cin, Cmid, Cout, act_bytes)
    assert H % tile_h == 0, "tile_h must divide H"
    n_tiles = H // tile_h

    flops = 2 * N * H * W * (Cin * Cmid + 9 * Cmid * Cmid + Cmid * Cout)
    bytes_accessed = (N * H * W * Cin * act_bytes
                      + N * H * W * Cout * jnp.dtype(out_dtype).itemsize
                      + sum(int(p.size) * p.dtype.itemsize for p in params))
    cost = pl.CostEstimate(flops=int(flops), transcendentals=0,
                           bytes_accessed=int(bytes_accessed))

    def full_spec(arr):
        nd = arr.ndim
        return pl.BlockSpec(arr.shape, lambda n, j: (0,) * nd)

    cp_kwargs = dict(dimension_semantics=("parallel", "parallel"))
    if vmem_limit_bytes is not None:
        cp_kwargs["vmem_limit_bytes"] = int(vmem_limit_bytes)

    return pl.pallas_call(
        bottleneck_kernel,
        out_shape=jax.ShapeDtypeStruct((N, H, W, Cout), out_dtype),
        grid=(N, n_tiles),
        in_specs=[
            # Full unpadded image per batch element (resident across j).
            pl.BlockSpec((1, H, W, Cin), lambda n, j: (n, 0, 0, 0)),
            full_spec(w1), full_spec(b1),
            full_spec(w2), full_spec(b2),
            full_spec(w3), full_spec(b3),
        ],
        out_specs=pl.BlockSpec((1, tile_h, W, Cout), lambda n, j: (n, j, 0, 0)),
        compiler_params=pltpu.CompilerParams(**cp_kwargs),
        cost_estimate=cost,
    )(x_nhwc, w1, b1, w2, b2, w3, b3)


def make_params(key, inplanes, planes, expansion=4, eps=1e-5,
                dtype=jnp.bfloat16):
    """Deterministic synthetic params; BN scale folded into conv weights."""
    cout = planes * expansion
    ks = jax.random.split(key, 15)

    # torch conv weights (out, in, kh, kw), no bias
    w1_t = jax.random.normal(ks[0], (planes, inplanes, 1, 1), jnp.float32) * 0.1
    w2_t = jax.random.normal(ks[1], (planes, planes, 3, 3), jnp.float32) * 0.1
    w3_t = jax.random.normal(ks[2], (cout, planes, 1, 1), jnp.float32) * 0.1

    def bn(k4, c):
        g = 1.0 + 0.1 * jax.random.normal(k4[0], (c,), jnp.float32)
        beta = 0.1 * jax.random.normal(k4[1], (c,), jnp.float32)
        mean = 0.1 * jax.random.normal(k4[2], (c,), jnp.float32)
        var = jnp.abs(jax.random.normal(k4[3], (c,), jnp.float32)) + 0.5
        scale = g / jnp.sqrt(var + eps)
        bias = beta - mean * scale
        return scale.reshape(1, c), bias.reshape(1, c)

    s1, b1 = bn(ks[3:7], planes)
    s2, b2 = bn(ks[7:11], planes)
    s3, b3 = bn(ks[11:15], cout)

    # Kernel layouts with BN scale folded in (scales output columns).
    w1 = (w1_t[:, :, 0, 0].T * s1).astype(dtype)               # (Cin, Cmid)
    # conv2 weights as (3, 3*Cmid, Cmid): block ky, rows ordered [kx=0|1|2].
    w2 = jnp.stack([jnp.concatenate([w2_t[:, :, ky, kx].T for kx in range(3)],
                                    axis=0)
                    for ky in range(3)], axis=0)
    w2 = (w2 * s2).astype(dtype)                               # (3, 3*Cmid, Cmid)
    w3 = (w3_t[:, :, 0, 0].T * s3).astype(dtype)               # (Cmid, Cout)
    return (w1, b1.astype(jnp.float32),
            w2, b2.astype(jnp.float32),
            w3, b3.astype(jnp.float32))


def reference_nhwc(x_nhwc, params, out_dtype):
    """Pure-JAX reference using the same BN-folded bf16 params."""
    w1, b1, w2, b2, w3, b3 = params
    Cmid = w1.shape[1]
    h1 = jnp.einsum('nhwc,cd->nhwd', x_nhwc, w1,
                    preferred_element_type=jnp.float32) + b1
    h1 = jnp.maximum(h1, 0.0).astype(w1.dtype)
    w2_hwio = w2.reshape(3, 3, Cmid, Cmid)          # (ky, kx, ci, co) = HWIO
    h2 = lax.conv_general_dilated(h1, w2_hwio, (1, 1), 'SAME',
                                  dimension_numbers=('NHWC', 'HWIO', 'NHWC'),
                                  preferred_element_type=jnp.float32) + b2
    h2 = jnp.maximum(h2, 0.0).astype(w1.dtype)
    h3 = jnp.einsum('nhwc,cd->nhwd', h2, w3,
                    preferred_element_type=jnp.float32) + b3
    out = jnp.maximum(h3 + x_nhwc.astype(jnp.float32), 0.0)
    return out.astype(out_dtype)


if __name__ == "__main__":
    # Small shapes: Bottleneck(inplanes=16, planes=4) -> out channels 16.
    N, H, W = 2, 16, 16
    planes, expansion = 4, 4
    inplanes = planes * expansion                      # residual-compatible

    key = jax.random.PRNGKey(0)
    kx, kp = jax.random.split(key)
    x_nchw = jax.random.normal(kx, (N, inplanes, H, W), jnp.float32)

    params = make_params(kp, inplanes, planes, expansion, dtype=jnp.bfloat16)
    x_nhwc = jnp.transpose(x_nchw, (0, 2, 3, 1)).astype(jnp.bfloat16)

    ref_nchw = jnp.transpose(reference_nhwc(x_nhwc, params, jnp.bfloat16),
                             (0, 3, 1, 2))
    ref_np = np.asarray(ref_nchw.astype(jnp.float32))

    # Multi-tile path (exercises first / interior / last tile halo handling).
    out_nhwc = bottleneck_pallas(x_nhwc, params, tile_h=4,
                                 out_dtype=jnp.bfloat16)
    out_nchw = jnp.transpose(out_nhwc, (0, 3, 1, 2))   # back to NCHW
    jax.block_until_ready(out_nchw)
    np.testing.assert_allclose(np.asarray(out_nchw.astype(jnp.float32)),
                               ref_np, rtol=2e-2, atol=2e-2)

    # Default (auto tile_h, single-tile) path.
    out2 = bottleneck_pallas(x_nhwc, params, out_dtype=jnp.bfloat16)
    jax.block_until_ready(out2)
    np.testing.assert_allclose(
        np.asarray(jnp.transpose(out2, (0, 3, 1, 2)).astype(jnp.float32)),
        ref_np, rtol=2e-2, atol=2e-2)

    print("KERNEL_OK")
</pallas_src>

<mosaic_0001>
module attributes {stable_mosaic.version = 11 : i64} {
  func.func @bottleneck_kernel(%arg0: i32, %arg1: i32, %arg2: memref<1x16x16x16xbf16, #tpu.memory_space<vmem>>, %arg3: memref<16x4xbf16, #tpu.memory_space<vmem>>, %arg4: memref<1x4xf32, #tpu.memory_space<vmem>>, %arg5: memref<3x12x4xbf16, #tpu.memory_space<vmem>>, %arg6: memref<1x4xf32, #tpu.memory_space<vmem>>, %arg7: memref<4x16xbf16, #tpu.memory_space<vmem>>, %arg8: memref<1x16xf32, #tpu.memory_space<vmem>>, %arg9: memref<1x4x16x16xbf16, #tpu.memory_space<vmem>>) attributes {dimension_semantics = [#tpu.dimension_semantics<parallel>, #tpu.dimension_semantics<parallel>], iteration_bounds = array<i64: 2, 4>, scalar_prefetch = 0 : i64, scratch_operands = 0 : i64, tpu.core_type = #tpu.core_type<tc>, window_params = [{transform_indices = @transform_0, window_bounds = array<i64: 1, 16, 16, 16>}, {pipeline_mode = #tpu.pipeline_mode<synchronous>, transform_indices = @transform_1, window_bounds = array<i64: 16, 4>}, {pipeline_mode = #tpu.pipeline_mode<synchronous>, transform_indices = @transform_2, window_bounds = array<i64: 1, 4>}, {pipeline_mode = #tpu.pipeline_mode<synchronous>, transform_indices = @transform_3, window_bounds = array<i64: 3, 12, 4>}, {pipeline_mode = #tpu.pipeline_mode<synchronous>, transform_indices = @transform_4, window_bounds = array<i64: 1, 4>}, {pipeline_mode = #tpu.pipeline_mode<synchronous>, transform_indices = @transform_5, window_bounds = array<i64: 4, 16>}, {pipeline_mode = #tpu.pipeline_mode<synchronous>, transform_indices = @transform_6, window_bounds = array<i64: 1, 16>}, {transform_indices = @transform_7, window_bounds = array<i64: 1, 4, 16, 16>}]} {
    %c4_i32 = arith.constant 4 : i32
    %0 = arith.muli %arg1, %c4_i32 : i32
    %c0 = arith.constant 0 : index
    %1 = arith.index_cast %0 : i32 to index
    %c0_0 = arith.constant 0 : index
    %c0_1 = arith.constant 0 : index
    %2 = vector.load %arg2[%c0, %1, %c0_0, %c0_1] : memref<1x16x16x16xbf16, #tpu.memory_space<vmem>>, vector<1x4x16x16xbf16>
    %3 = vector.shape_cast %2 : vector<1x4x16x16xbf16> to vector<4x16x16xbf16>
    %c1_i32 = arith.constant 1 : i32
    %4 = arith.subi %0, %c1_i32 : i32
    %c0_i32 = arith.constant 0 : i32
    %5 = arith.maxsi %4, %c0_i32 : i32
    %c4_i32_2 = arith.constant 4 : i32
    %6 = arith.addi %0, %c4_i32_2 : i32
    %c15_i32 = arith.constant 15 : i32
    %7 = arith.minsi %6, %c15_i32 : i32
    %c0_3 = arith.constant 0 : index
    %8 = arith.index_cast %5 : i32 to index
    %c0_4 = arith.constant 0 : index
    %c0_5 = arith.constant 0 : index
    %9 = vector.load %arg2[%c0_3, %8, %c0_4, %c0_5] : memref<1x16x16x16xbf16, #tpu.memory_space<vmem>>, vector<1x1x16x16xbf16>
    %10 = vector.shape_cast %9 : vector<1x1x16x16xbf16> to vector<1x16x16xbf16>
    %c0_6 = arith.constant 0 : index
    %11 = arith.index_cast %7 : i32 to index
    %c0_7 = arith.constant 0 : index
    %c0_8 = arith.constant 0 : index
    %12 = vector.load %arg2[%c0_6, %11, %c0_7, %c0_8] : memref<1x16x16x16xbf16, #tpu.memory_space<vmem>>, vector<1x1x16x16xbf16>
    %13 = vector.shape_cast %12 : vector<1x1x16x16xbf16> to vector<1x16x16xbf16>
    %14 = tpu.concatenate %10, %3, %13 in 0 : vector<1x16x16xbf16>, vector<4x16x16xbf16>, vector<1x16x16xbf16> -> vector<6x16x16xbf16>
    %15 = vector.shape_cast %14 : vector<6x16x16xbf16> to vector<96x16xbf16>
    %c0_9 = arith.constant 0 : index
    %c0_10 = arith.constant 0 : index
    %16 = vector.load %arg3[%c0_9, %c0_10] : memref<16x4xbf16, #tpu.memory_space<vmem>>, vector<16x4xbf16>
    %cst = arith.constant dense<0.000000e+00> : vector<96x4xf32>
    %17 = tpu.matmul %15, %16, %cst {dimension_numbers = #tpu.dot_dimension_numbers<[1], [0], [0], [1], [0, 0, 1, 1], [], []>} : vector<96x16xbf16>, vector<16x4xbf16>, vector<96x4xf32> -> vector<96x4xf32>
    %c0_11 = arith.constant 0 : index
    %c0_12 = arith.constant 0 : index
    %18 = vector.load %arg4[%c0_11, %c0_12] : memref<1x4xf32, #tpu.memory_space<vmem>>, vector<1x4xf32>
    %19 = vector.broadcast %18 : vector<1x4xf32> to vector<96x4xf32>
    %20 = arith.addf %17, %19 : vector<96x4xf32>
    %cst_13 = arith.constant 0.000000e+00 : f32
    %21 = vector.broadcast %cst_13 : f32 to vector<96x4xf32>
    %22 = arith.maximumf %20, %21 : vector<96x4xf32>
    %23 = vector.shape_cast %22 : vector<96x4xf32> to vector<6x16x4xf32>
    %24 = tpu.iota {dimensions = array<i32: 0>} : vector<6x1x1xi32>
    %c0_i32_14 = arith.constant 0 : i32
    %25 = vector.broadcast %c0_i32_14 : i32 to vector<6x1x1xi32>
    %26 = arith.cmpi sgt, %24, %25 : vector<6x1x1xi32>
    %c0_i32_15 = arith.constant 0 : i32
    %27 = arith.cmpi sgt, %arg1, %c0_i32_15 : i32
    %28 = vector.broadcast %27 : i1 to vector<6x1x1xi1>
    %29 = arith.ori %26, %28 : vector<6x1x1xi1>
    %c5_i32 = arith.constant 5 : i32
    %30 = vector.broadcast %c5_i32 : i32 to vector<6x1x1xi32>
    %31 = arith.cmpi slt, %24, %30 : vector<6x1x1xi32>
    %c3_i32 = arith.constant 3 : i32
    %32 = arith.cmpi slt, %arg1, %c3_i32 : i32
    %33 = vector.broadcast %32 : i1 to vector<6x1x1xi1>
    %34 = arith.ori %31, %33 : vector<6x1x1xi1>
    %35 = arith.andi %29, %34 : vector<6x1x1xi1>
    %cst_16 = arith.constant 0.000000e+00 : f32
    %36 = vector.shape_cast %35 : vector<6x1x1xi1> to vector<6x1x1xi1>
    %37 = vector.broadcast %36 : vector<6x1x1xi1> to vector<6x16x4xi1>
    %38 = vector.broadcast %cst_16 : f32 to vector<6x16x4xf32>
    %39 = arith.select %37, %23, %38 : vector<6x16x4xi1>, vector<6x16x4xf32>
    %40 = arith.truncf %39 : vector<6x16x4xf32> to vector<6x16x4xbf16>
    %cst_17 = arith.constant 0.000000e+00 : bf16
    %41 = vector.broadcast %cst_17 : bf16 to vector<6x1x4xbf16>
    %42 = vector.extract_strided_slice %40 {offsets = [0, 0, 0], sizes = [6, 15, 4], strides = [1, 1, 1]} : vector<6x16x4xbf16> to vector<6x15x4xbf16>
    %43 = tpu.concatenate %41, %42 in 1 : vector<6x1x4xbf16>, vector<6x15x4xbf16> -> vector<6x16x4xbf16>
    %44 = vector.extract_strided_slice %40 {offsets = [0, 1, 0], sizes = [6, 15, 4], strides = [1, 1, 1]} : vector<6x16x4xbf16> to vector<6x15x4xbf16>
    %45 = tpu.concatenate %44, %41 in 1 : vector<6x15x4xbf16>, vector<6x1x4xbf16> -> vector<6x16x4xbf16>
    %46 = tpu.concatenate %43, %40, %45 in 2 : vector<6x16x4xbf16>, vector<6x16x4xbf16>, vector<6x16x4xbf16> -> vector<6x16x12xbf16>
    %47 = vector.extract_strided_slice %46 {offsets = [0, 0, 0], sizes = [4, 16, 12], strides = [1, 1, 1]} : vector<6x16x12xbf16> to vector<4x16x12xbf16>
    %48 = vector.shape_cast %47 : vector<4x16x12xbf16> to vector<64x12xbf16>
    %c0_18 = arith.constant 0 : index
    %c0_19 = arith.constant 0 : index
    %c0_20 = arith.constant 0 : index
    %49 = vector.load %arg5[%c0_18, %c0_19, %c0_20] : memref<3x12x4xbf16, #tpu.memory_space<vmem>>, vector<1x12x4xbf16>
    %50 = vector.shape_cast %49 : vector<1x12x4xbf16> to vector<12x4xbf16>
    %cst_21 = arith.constant dense<0.000000e+00> : vector<64x4xf32>
    %51 = tpu.matmul %48, %50, %cst_21 {dimension_numbers = #tpu.dot_dimension_numbers<[1], [0], [0], [1], [0, 0, 1, 1], [], []>} : vector<64x12xbf16>, vector<12x4xbf16>, vector<64x4xf32> -> vector<64x4xf32>
    %52 = vector.extract_strided_slice %46 {offsets = [1, 0, 0], sizes = [4, 16, 12], strides = [1, 1, 1]} : vector<6x16x12xbf16> to vector<4x16x12xbf16>
    %53 = vector.shape_cast %52 : vector<4x16x12xbf16> to vector<64x12xbf16>
    %c1 = arith.constant 1 : index
    %c0_22 = arith.constant 0 : index
    %c0_23 = arith.constant 0 : index
    %54 = vector.load %arg5[%c1, %c0_22, %c0_23] : memref<3x12x4xbf16, #tpu.memory_space<vmem>>, vector<1x12x4xbf16>
    %55 = vector.shape_cast %54 : vector<1x12x4xbf16> to vector<12x4xbf16>
    %cst_24 = arith.constant dense<0.000000e+00> : vector<64x4xf32>
    %56 = tpu.matmul %53, %55, %cst_24 {dimension_numbers = #tpu.dot_dimension_numbers<[1], [0], [0], [1], [0, 0, 1, 1], [], []>} : vector<64x12xbf16>, vector<12x4xbf16>, vector<64x4xf32> -> vector<64x4xf32>
    %57 = arith.addf %51, %56 : vector<64x4xf32>
    %58 = vector.extract_strided_slice %46 {offsets = [2, 0, 0], sizes = [4, 16, 12], strides = [1, 1, 1]} : vector<6x16x12xbf16> to vector<4x16x12xbf16>
    %59 = vector.shape_cast %58 : vector<4x16x12xbf16> to vector<64x12xbf16>
    %c2 = arith.constant 2 : index
    %c0_25 = arith.constant 0 : index
    %c0_26 = arith.constant 0 : index
    %60 = vector.load %arg5[%c2, %c0_25, %c0_26] : memref<3x12x4xbf16, #tpu.memory_space<vmem>>, vector<1x12x4xbf16>
    %61 = vector.shape_cast %60 : vector<1x12x4xbf16> to vector<12x4xbf16>
    %cst_27 = arith.constant dense<0.000000e+00> : vector<64x4xf32>
    %62 = tpu.matmul %59, %61, %cst_27 {dimension_numbers = #tpu.dot_dimension_numbers<[1], [0], [0], [1], [0, 0, 1, 1], [], []>} : vector<64x12xbf16>, vector<12x4xbf16>, vector<64x4xf32> -> vector<64x4xf32>
    %63 = arith.addf %57, %62 : vector<64x4xf32>
    %c0_28 = arith.constant 0 : index
    %c0_29 = arith.constant 0 : index
    %64 = vector.load %arg6[%c0_28, %c0_29] : memref<1x4xf32, #tpu.memory_space<vmem>>, vector<1x4xf32>
    %65 = vector.broadcast %64 : vector<1x4xf32> to vector<64x4xf32>
    %66 = arith.addf %63, %65 : vector<64x4xf32>
    %cst_30 = arith.constant 0.000000e+00 : f32
    %67 = vector.broadcast %cst_30 : f32 to vector<64x4xf32>
    %68 = arith.maximumf %66, %67 : vector<64x4xf32>
    %69 = arith.truncf %68 : vector<64x4xf32> to vector<64x4xbf16>
    %c0_31 = arith.constant 0 : index
    %c0_32 = arith.constant 0 : index
    %70 = vector.load %arg7[%c0_31, %c0_32] : memref<4x16xbf16, #tpu.memory_space<vmem>>, vector<4x16xbf16>
    %cst_33 = arith.constant dense<0.000000e+00> : vector<64x16xf32>
    %71 = tpu.matmul %69, %70, %cst_33 {dimension_numbers = #tpu.dot_dimension_numbers<[1], [0], [0], [1], [0, 0, 1, 1], [], []>} : vector<64x4xbf16>, vector<4x16xbf16>, vector<64x16xf32> -> vector<64x16xf32>
    %c0_34 = arith.constant 0 : index
    %c0_35 = arith.constant 0 : index
    %72 = vector.load %arg8[%c0_34, %c0_35] : memref<1x16xf32, #tpu.memory_space<vmem>>, vector<1x16xf32>
    %73 = vector.broadcast %72 : vector<1x16xf32> to vector<64x16xf32>
    %74 = arith.addf %71, %73 : vector<64x16xf32>
    %75 = vector.shape_cast %3 : vector<4x16x16xbf16> to vector<64x16xbf16>
    %76 = arith.extf %75 : vector<64x16xbf16> to vector<64x16xf32>
    %77 = arith.addf %74, %76 : vector<64x16xf32>
    %cst_36 = arith.constant 0.000000e+00 : f32
    %78 = vector.broadcast %cst_36 : f32 to vector<64x16xf32>
    %79 = arith.maximumf %77, %78 : vector<64x16xf32>
    %80 = vector.shape_cast %79 : vector<64x16xf32> to vector<1x4x16x16xf32>
    %81 = arith.truncf %80 : vector<1x4x16x16xf32> to vector<1x4x16x16xbf16>
    %c0_37 = arith.constant 0 : index
    %c0_38 = arith.constant 0 : index
    %c0_39 = arith.constant 0 : index
    %c0_40 = arith.constant 0 : index
    %82 = vector.load %arg9[%c0_37, %c0_38, %c0_39, %c0_40] : memref<1x4x16x16xbf16, #tpu.memory_space<vmem>>, vector<1x4x16x16xbf16>
    tpu.vector_store %arg9[%c0_37, %c0_38, %c0_39, %c0_40], %81 {strides = array<i32>} : memref<1x4x16x16xbf16, #tpu.memory_space<vmem>>, vector<1x4x16x16xbf16>,
    return
  }
  func.func @transform_0(%arg0: i32, %arg1: i32) -> (i32, i32, i32, i32) {
    %c0_i32 = arith.constant 0 : i32
    %c0_i32_0 = arith.constant 0 : i32
    %c0_i32_1 = arith.constant 0 : i32
    %c0_i32_2 = arith.constant 0 : i32
    return %arg0, %c0_i32, %c0_i32_0, %c0_i32_1 : i32, i32, i32, i32
  }
  func.func @transform_1(%arg0: i32, %arg1: i32) -> (i32, i32) {
    %c0_i32 = arith.constant 0 : i32
    %c0_i32_0 = arith.constant 0 : i32
    %c0_i32_1 = arith.constant 0 : i32
    return %c0_i32, %c0_i32_0 : i32, i32
  }
  func.func @transform_2(%arg0: i32, %arg1: i32) -> (i32, i32) {
    %c0_i32 = arith.constant 0 : i32
    %c0_i32_0 = arith.constant 0 : i32
    %c0_i32_1 = arith.constant 0 : i32
    return %c0_i32, %c0_i32_0 : i32, i32
  }
  func.func @transform_3(%arg0: i32, %arg1: i32) -> (i32, i32, i32) {
    %c0_i32 = arith.constant 0 : i32
    %c0_i32_0 = arith.constant 0 : i32
    %c0_i32_1 = arith.constant 0 : i32
    %c0_i32_2 = arith.constant 0 : i32
    return %c0_i32, %c0_i32_0, %c0_i32_1 : i32, i32, i32
  }
  func.func @transform_4(%arg0: i32, %arg1: i32) -> (i32, i32) {
    %c0_i32 = arith.constant 0 : i32
    %c0_i32_0 = arith.constant 0 : i32
    %c0_i32_1 = arith.constant 0 : i32
    return %c0_i32, %c0_i32_0 : i32, i32
  }
  func.func @transform_5(%arg0: i32, %arg1: i32) -> (i32, i32) {
    %c0_i32 = arith.constant 0 : i32
    %c0_i32_0 = arith.constant 0 : i32
    %c0_i32_1 = arith.constant 0 : i32
    return %c0_i32, %c0_i32_0 : i32, i32
  }
  func.func @transform_6(%arg0: i32, %arg1: i32) -> (i32, i32) {
    %c0_i32 = arith.constant 0 : i32
    %c0_i32_0 = arith.constant 0 : i32
    %c0_i32_1 = arith.constant 0 : i32
    return %c0_i32, %c0_i32_0 : i32, i32
  }
  func.func @transform_7(%arg0: i32, %arg1: i32) -> (i32, i32, i32, i32) {
    %c0_i32 = arith.constant 0 : i32
    %c0_i32_0 = arith.constant 0 : i32
    %c0_i32_1 = arith.constant 0 : i32
    return %arg0, %arg1, %c0_i32, %c0_i32_0 : i32, i32, i32, i32
  }
}

</mosaic_0001>

<llo_original>
// kernel: tpu_custom_call.1
$region0: #{tpu_custom_call.1}
  #allocation0 [shape = 'u32[]', space=smem, size = 0x4, offset = 0x4, fixed_abs, tag = 'smem constant byte address 0x4 - core index']
  #allocation1 [shape = 'u32[144,128]{1,0:T(1,128)}', space=vmem, size = 0x12000, scoped, tag = 'internal scratch']
  %s0 = inlined_call_operand.hbm [shape: bf16[2,16,16,16], index: 0, kind: input, shape index: {}]
  %s1 = inlined_call_operand.vmem [shape: bf16[16,4], index: 1, kind: input, shape index: {}]
  %s2 = inlined_call_operand.vmem [shape: f32[1,4], index: 2, kind: input, shape index: {}]
  %s3 = inlined_call_operand.vmem [shape: bf16[3,12,4], index: 3, kind: input, shape index: {}]
  %s4 = inlined_call_operand.vmem [shape: f32[1,4], index: 4, kind: input, shape index: {}]
  %s5 = inlined_call_operand.vmem [shape: bf16[4,16], index: 5, kind: input, shape index: {}]
  %s6 = inlined_call_operand.vmem [shape: f32[1,16], index: 6, kind: input, shape index: {}]
  %s7 = inlined_call_operand.hbm [shape: bf16[2,16,16,16], index: 7, kind: output, shape index: {}]
  %s8 = sld [smem:[#allocation0]]
  $region65: #{tpu_custom_call.1} parent=0
    _
  %s10 = ssub.s32 1, %s8
  %s11 = scalar_select 0, %s10, %s8
  $region1: #{tpu_custom_call.1} parent=0
    #allocation2 [shape = 'u8[131072]{0}', space=vmem, size = 0x20000, scoped, tag = 'input window, operand 0']
    #allocation3 [shape = 's32[2]{0}', space=sflag, size = 0x8, scoped, tag = 'scoped memory for tpu_custom_call.1']
    #allocation4 [shape = 's32[2]{0}', space=sflag, size = 0x8, scoped, tag = 'scoped memory for tpu_custom_call.1']
    #allocation5 [shape = 'u8[32768]{0}', space=vmem, size = 0x8000, scoped, tag = 'output window, operand 0']
    %12 = vsyncpa [#allocation3], 0
    %s13 = scalar_lea.sflag [#allocation3], 1
    %14 = vsyncpa %s13, 0
    %15 = vsyncpa [#allocation4], 0
    %s16 = scalar_lea.sflag [#allocation4], 1
    %17 = vsyncpa %s16, 0
    loop: start=0, step=1, limit=10
    $region2: #{tpu_custom_call.1} parent=1 // loop_pre_header
      _
    $region3: #{tpu_custom_call.1} parent=1 // loop_header
      %s19 = sphi 0, %s23
      %p20 = scmp.ge.s32.totalorder %s19, 10
      %s26 = sphi 0, %s38
      %s27 = sphi 0, %s34
      %s28 = sphi 0, %s26
      %s29 = sphi 0, %s27
      %s30 = sphi 0, %s28
      %s31 = sphi 0, %s29
      %s41 = sphi 0, %s43
      %s44 = sphi 0, %s41
      %s45 = sphi 0, %s44
      %s61 = sphi 0, %s45
      %s65 = sphi 0, %s65
      %s67 = sphi 0, %s65
      %s68 = sphi 0, %s67
      %s82 = sphi 0, %s68
      %s86 = sphi 0, %s86
      %s88 = sphi 0, %s86
      %s89 = sphi 0, %s88
      %s103 = sphi 0, %s89
      %s107 = sphi 0, %s107
      %s109 = sphi 0, %s107
      %s110 = sphi 0, %s109
      %s124 = sphi 0, %s110
      %s128 = sphi 0, %s128
      %s130 = sphi 0, %s128
      %s131 = sphi 0, %s130
      %s145 = sphi 0, %s131
      %s149 = sphi 0, %s149
      %s151 = sphi 0, %s149
      %s152 = sphi 0, %s151
      %s166 = sphi 0, %s152
      %s170 = sphi 0, %s170
      %s172 = sphi 0, %s170
      %s173 = sphi 0, %s172
      %s187 = sphi 0, %s173
      %s195 = sphi 0, %s197
      %s198 = sphi 0, %s195
      %s199 = sphi 0, %s198
      %s215 = sphi 0, %s199
    $region4: #{tpu_custom_call.1} parent=1 // loop_header_branch
      %22 = sbr.rel (%p20) target = $region8
    $region5: #{tpu_custom_call.1} parent=1 // loop_body
      %s24 = ssub.s32 %s19, 1
      %s25 = ssub.s32 %s19, 2
      %s32 = sadd.s32 1, %s27
      %p33 = scmp.ge.s32.totalorder %s32, 4
      %s34 = scalar_select %p33, 0, %s32
      %s35 = sadd.s32 1, %s26
      %s36 = scalar_select %p33, %s35, %s26
      %p37 = scmp.ge.s32.totalorder %s36, 2
      %s38 = scalar_select %p37, 0, %s36
      %s39 = ssub.s32 %s26, %s38
      %p40 = scmp.eq.s32.totalorder %s39, 0
      %s42 = sadd.s32 %s41, 1
      %s43 = scalar_select %p40, %s41, %s42
      %p46 = pneg %p40
      %p47 = scmp.eq.s32.totalorder %s19, 7
      %p48 = por %p46, %p47
      %p49 = scmp.ne.s32.totalorder %s41, %s44
      %p50 = scmp.eq.s32.totalorder %s19, 0
      %p51 = por %p49, %p50
      %p52 = scmp.ne.s32.totalorder %s41, %s44
      %p53 = scmp.eq.s32.totalorder %s24, 7
      %p54 = por %p52, %p53
      %p55 = scmp.ne.s32.totalorder %s44, %s45
      %p56 = scmp.eq.s32.totalorder %s24, 0
      %p57 = por %p55, %p56
      %p58 = scmp.ne.s32.totalorder %s44, %s45
      %p59 = scmp.eq.s32.totalorder %s25, 7
      %p60 = por %p58, %p59
      %p62 = scmp.ne.s32.totalorder %s45, %s61
      %p63 = scmp.eq.s32.totalorder %s25, 0
      %p64 = por %p62, %p63
      %s66 = sadd.s32 %s65, 1
      %p69 = scmp.eq.s32.totalorder %s19, 7
      %p70 = scmp.ne.s32.totalorder %s65, %s67
      %p71 = scmp.eq.s32.totalorder %s19, 0
      %p72 = por %p70, %p71
      %p73 = scmp.ne.s32.totalorder %s65, %s67
      %p74 = scmp.eq.s32.totalorder %s24, 7
      %p75 = por %p73, %p74
      %p76 = scmp.ne.s32.totalorder %s67, %s68
      %p77 = scmp.eq.s32.totalorder %s24, 0
      %p78 = por %p76, %p77
      %p79 = scmp.ne.s32.totalorder %s67, %s68
      %p80 = scmp.eq.s32.totalorder %s25, 7
      %p81 = por %p79, %p80
      %p83 = scmp.ne.s32.totalorder %s68, %s82
      %p84 = scmp.eq.s32.totalorder %s25, 0
      %p85 = por %p83, %p84
      %s87 = sadd.s32 %s86, 1
      %p90 = scmp.eq.s32.totalorder %s19, 7
      %p91 = scmp.ne.s32.totalorder %s86, %s88
      %p92 = scmp.eq.s32.totalorder %s19, 0
      %p93 = por %p91, %p92
      %p94 = scmp.ne.s32.totalorder %s86, %s88
      %p95 = scmp.eq.s32.totalorder %s24, 7
      %p96 = por %p94, %p95
      %p97 = scmp.ne.s32.totalorder %s88, %s89
      %p98 = scmp.eq.s32.totalorder %s24, 0
      %p99 = por %p97, %p98
      %p100 = scmp.ne.s32.totalorder %s88, %s89
      %p101 = scmp.eq.s32.totalorder %s25, 7
      %p102 = por %p100, %p101
      %p104 = scmp.ne.s32.totalorder %s89, %s103
      %p105 = scmp.eq.s32.totalorder %s25, 0
      %p106 = por %p104, %p105
      %s108 = sadd.s32 %s107, 1
      %p111 = scmp.eq.s32.totalorder %s19, 7
      %p112 = scmp.ne.s32.totalorder %s107, %s109
      %p113 = scmp.eq.s32.totalorder %s19, 0
      %p114 = por %p112, %p113
      %p115 = scmp.ne.s32.totalorder %s107, %s109
      %p116 = scmp.eq.s32.totalorder %s24, 7
      %p117 = por %p115, %p116
      %p118 = scmp.ne.s32.totalorder %s109, %s110
      %p119 = scmp.eq.s32.totalorder %s24, 0
      %p120 = por %p118, %p119
      %p121 = scmp.ne.s32.totalorder %s109, %s110
      %p122 = scmp.eq.s32.totalorder %s25, 7
      %p123 = por %p121, %p122
      %p125 = scmp.ne.s32.totalorder %s110, %s124
      %p126 = scmp.eq.s32.totalorder %s25, 0
      %p127 = por %p125, %p126
      %s129 = sadd.s32 %s128, 1
      %p132 = scmp.eq.s32.totalorder %s19, 7
      %p133 = scmp.ne.s32.totalorder %s128, %s130
      %p134 = scmp.eq.s32.totalorder %s19, 0
      %p135 = por %p133, %p134
      %p136 = scmp.ne.s32.totalorder %s128, %s130
      %p137 = scmp.eq.s32.totalorder %s24, 7
      %p138 = por %p136, %p137
      %p139 = scmp.ne.s32.totalorder %s130, %s131
      %p140 = scmp.eq.s32.totalorder %s24, 0
      %p141 = por %p139, %p140
      %p142 = scmp.ne.s32.totalorder %s130, %s131
      %p143 = scmp.eq.s32.totalorder %s25, 7
      %p144 = por %p142, %p143
      %p146 = scmp.ne.s32.totalorder %s131, %s145
      %p147 = scmp.eq.s32.totalorder %s25, 0
      %p148 = por %p146, %p147
      %s150 = sadd.s32 %s149, 1
      %p153 = scmp.eq.s32.totalorder %s19, 7
      %p154 = scmp.ne.s32.totalorder %s149, %s151
      %p155 = scmp.eq.s32.totalorder %s19, 0
      %p156 = por %p154, %p155
      %p157 = scmp.ne.s32.totalorder %s149, %s151
      %p158 = scmp.eq.s32.totalorder %s24, 7
      %p159 = por %p157, %p158
      %p160 = scmp.ne.s32.totalorder %s151, %s152
      %p161 = scmp.eq.s32.totalorder %s24, 0
      %p162 = por %p160, %p161
      %p163 = scmp.ne.s32.totalorder %s151, %s152
      %p164 = scmp.eq.s32.totalorder %s25, 7
      %p165 = por %p163, %p164
      %p167 = scmp.ne.s32.totalorder %s152, %s166
      %p168 = scmp.eq.s32.totalorder %s25, 0
      %p169 = por %p167, %p168
      %s171 = sadd.s32 %s170, 1
      %p174 = scmp.eq.s32.totalorder %s19, 7
      %p175 = scmp.ne.s32.totalorder %s170, %s172
      %p176 = scmp.eq.s32.totalorder %s19, 0
      %p177 = por %p175, %p176
      %p178 = scmp.ne.s32.totalorder %s170, %s172
      %p179 = scmp.eq.s32.totalorder %s24, 7
      %p180 = por %p178, %p179
      %p181 = scmp.ne.s32.totalorder %s172, %s173
      %p182 = scmp.eq.s32.totalorder %s24, 0
      %p183 = por %p181, %p182
      %p184 = scmp.ne.s32.totalorder %s172, %s173
      %p185 = scmp.eq.s32.totalorder %s25, 7
      %p186 = por %p184, %p185
      %p188 = scmp.ne.s32.totalorder %s173, %s187
      %p189 = scmp.eq.s32.totalorder %s25, 0
      %p190 = por %p188, %p189
      %s191 = ssub.s32 %s26, %s38
      %s192 = ssub.s32 %s27, %s34
      %s193 = sor.u32 %s191, %s192
      %p194 = scmp.eq.s32.totalorder %s193, 0
      %s196 = sadd.s32 %s195, 1
      %s197 = scalar_select %p194, %s195, %s196
      %p200 = pneg %p194
      %p201 = scmp.eq.s32.totalorder %s19, 7
      %p202 = por %p200, %p201
      %p203 = scmp.ne.s32.totalorder %s195, %s198
      %p204 = scmp.eq.s32.totalorder %s19, 0
      %p205 = por %p203, %p204
      %p206 = scmp.ne.s32.totalorder %s195, %s198
      %p207 = scmp.eq.s32.totalorder %s24, 7
      %p208 = por %p206, %p207
      %p209 = scmp.ne.s32.totalorder %s198, %s199
      %p210 = scmp.eq.s32.totalorder %s24, 0
      %p211 = por %p209, %p210
      %p212 = scmp.ne.s32.totalorder %s198, %s199
      %p213 = scmp.eq.s32.totalorder %s25, 7
      %p214 = por %p212, %p213
      %p216 = scmp.ne.s32.totalorder %s199, %s215
      %p217 = scmp.eq.s32.totalorder %s25, 0
      %p218 = por %p216, %p217
      %p219 = scmp.le.s32.totalorder 1, %s19
      %p220 = scmp.lt.s32.totalorder %s19, 9
      %p221 = pnand %p219, %p220
      %p222 = pneg %p221
      // Predicated region
      $region9: #{tpu_custom_call.1} parent=5 // pred_check
        _
      $region10: #{tpu_custom_call.1} parent=5 // pred_check_branch
        %224 = sbr.rel (%p221) target = $region12
      $region11: #{tpu_custom_call.1} parent=5 // pred_region
        %s225 = ssub.s32 %s19, 1
        // Predicated region
        $region13: #{tpu_custom_call.1} parent=11 // pred_check
          %p226 = pneg %p78
        $region14: #{tpu_custom_call.1} parent=11 // pred_check_branch
          %228 = sbr.rel (%p226) target = $region16
        $region15: #{tpu_custom_call.1} parent=11 // pred_region
          _
        $region16: #{tpu_custom_call.1} parent=11 // pred_fallthru
          _
        // Predicated region
        $region17: #{tpu_custom_call.1} parent=11 // pred_check
          %p229 = pneg %p99
        $region18: #{tpu_custom_call.1} parent=11 // pred_check_branch
          %231 = sbr.rel (%p229) target = $region20
        $region19: #{tpu_custom_call.1} parent=11 // pred_region
          _
        $region20: #{tpu_custom_call.1} parent=11 // pred_fallthru
          _
        // Predicated region
        $region21: #{tpu_custom_call.1} parent=11 // pred_check
          %p232 = pneg %p120
        $region22: #{tpu_custom_call.1} parent=11 // pred_check_branch
          %234 = sbr.rel (%p232) target = $region24
        $region23: #{tpu_custom_call.1} parent=11 // pred_region
          _
        $region24: #{tpu_custom_call.1} parent=11 // pred_fallthru
          _
        // Predicated region
        $region25: #{tpu_custom_call.1} parent=11 // pred_check
          %p235 = pneg %p141
        $region26: #{tpu_custom_call.1} parent=11 // pred_check_branch
          %237 = sbr.rel (%p235) target = $region28
        $region27: #{tpu_custom_call.1} parent=11 // pred_region
          _
        $region28: #{tpu_custom_call.1} parent=11 // pred_fallthru
          _
        // Predicated region
        $region29: #{tpu_custom_call.1} parent=11 // pred_check
          %p238 = pneg %p162
        $region30: #{tpu_custom_call.1} parent=11 // pred_check_branch
          %240 = sbr.rel (%p238) target = $region32
        $region31: #{tpu_custom_call.1} parent=11 // pred_region
          _
        $region32: #{tpu_custom_call.1} parent=11 // pred_fallthru
          _
        // Predicated region
        $region33: #{tpu_custom_call.1} parent=11 // pred_check
          %p241 = pneg %p183
        $region34: #{tpu_custom_call.1} parent=11 // pred_check_branch
          %243 = sbr.rel (%p241) target = $region36
        $region35: #{tpu_custom_call.1} parent=11 // pred_region
          _
        $region36: #{tpu_custom_call.1} parent=11 // pred_fallthru
          _
      $region12: #{tpu_custom_call.1} parent=5 // pred_fallthru
        _
      %p244 = scmp.lt.s32.totalorder %s19, 8
      // Predicated region
      $region37: #{tpu_custom_call.1} parent=5 // pred_check
        %p245 = pneg %p244
      $region38: #{tpu_custom_call.1} parent=5 // pred_check_branch
        %247 = sbr.rel (%p245) target = $region40
      $region39: #{tpu_custom_call.1} parent=5 // pred_region
        // Predicated region
        $region41: #{tpu_custom_call.1} parent=39 // pred_check
          %p248 = pneg %p51
        $region42: #{tpu_custom_call.1} parent=39 // pred_check_branch
          %250 = sbr.rel (%p248) target = $region44
        $region43: #{tpu_custom_call.1} parent=39 // pred_region
          %s251 = sand.u32 %s41, 1
          %s252 = scalar_lea.sflag [#allocation3], %s251
          %s253 = sand.u32 %s41, 1
          %s254 = smul.addr %s253, 128
          %s255 = scalar_lea.vmem [#allocation2], %s254
          %s257 = ssub.s32 2048, 2048
          %258 = vsyncadd %s252, %s257
          %s259 = smul.addr %s26, 32
          %s260 = smul.addr %s259, 64
          %s261 = scalar_lea.hbm %s0, %s260
          %s262 = sshll.u32 %s255, 4
          %s263 = int_to_ptr.vmem [resolvable:$true] %s262
          %268 = dma.hbm_to_vmem [thread:$0]  %s261, 2048, %s263, %s252, 64, 64, 4
        $region44: #{tpu_custom_call.1} parent=39 // pred_fallthru
          _
      $region40: #{tpu_custom_call.1} parent=5 // pred_fallthru
        _
      %p269 = scmp.le.s32.totalorder 1, %s19
      %p270 = scmp.lt.s32.totalorder %s19, 9
      %p271 = pnand %p269, %p270
      %p272 = pneg %p271
      // Predicated region
      $region45: #{tpu_custom_call.1} parent=5 // pred_check
        _
      $region46: #{tpu_custom_call.1} parent=5 // pred_check_branch
        %274 = sbr.rel (%p271) target = $region48
      $region47: #{tpu_custom_call.1} parent=5 // pred_region
        %s275 = ssub.s32 %s19, 1
        %s276 = sand.u32 %s44, 1
        %s277 = scalar_lea.sflag [#allocation3], %s276
        %s278 = sand.u32 %s44, 1
        %s279 = smul.addr %s278, 128
        %s280 = scalar_lea.vmem [#allocation2], %s279
        // Predicated region
        $region49: #{tpu_custom_call.1} parent=47 // pred_check
          %p281 = pneg %p57
        $region50: #{tpu_custom_call.1} parent=47 // pred_check_branch
          %283 = sbr.rel (%p281) target = $region52
        $region51: #{tpu_custom_call.1} parent=47 // pred_region
          %284 = dma.done %s277, 2048
        $region52: #{tpu_custom_call.1} parent=47 // pred_fallthru
          _
        %s285 = sand.u32 %s44, 1
        %s286 = scalar_lea.sflag [#allocation3], %s285
        %s287 = sand.u32 %s44, 1
        %s288 = smul.addr %s287, 128
        %s289 = scalar_lea.vmem [#allocation2], %s288
        %p290 = pneg %p57
        %p291 = pneg %p54
        %p292 = pneg %p78
        %p293 = pneg %p75
        %p294 = pneg %p99
        %p295 = pneg %p96
        %p296 = pneg %p120
        %p297 = pneg %p117
        %p298 = pneg %p141
        %p299 = pneg %p138
        %p300 = pneg %p162
        %p301 = pneg %p159
        %p302 = pneg %p183
        %p303 = pneg %p180
        %p304 = pneg %p211
        %p305 = pneg %p208
        %s306 = sand.u32 %s198, 1
        %s307 = scalar_lea.sflag [#allocation4], %s306
        %s308 = sand.u32 %s198, 1
        %s309 = smul.addr %s308, 32
        %s310 = scalar_lea.vmem [#allocation5], %s309
        %s311 = smul.u32 4, %s29
        %s313 = smul.u32 %s29, 4
        %s314 = smul.u32 %s313, 2
        %s315 = smul.addr %s314, 4
        %s316 = scalar_lea.vmem %s280, %s315 [#allocation2]
        %v317 = vld [vmem:[%s316] sm:$0xf]
        %v318 = vld [vmem:[%s316 + $0x4] sm:$0xf]
        %v319 = vld [vmem:[%s316 + $0x8] sm:$0xf]
        %v320 = vld [vmem:[%s316 + $0xc] sm:$0xf]
        %v321 = vld [vmem:[%s316 + $0x10] sm:$0xf]
        %v322 = vld [vmem:[%s316 + $0x14] sm:$0xf]
        %v323 = vld [vmem:[%s316 + $0x18] sm:$0xf]
        %v324 = vld [vmem:[%s316 + $0x1c] sm:$0xf]
        %s325 = ssub.s32 %s313, 1
        %p326 = scmp.gt.s32.totalorder %s325, 0
        %s327 = scalar_select %p326, %s325, 0
        %s328 = sadd.s32 %s313, 4
        %p329 = scmp.lt.s32.totalorder %s328, 15
        %s330 = scalar_select %p329, %s328, 15
        %s331 = smul.u32 %s327, 2
        %s332 = smul.addr %s331, 4
        %s333 = scalar_lea.vmem %s280, %s332 [#allocation2]
        %v334 = vld [vmem:[%s333] sm:$0xf]
        %v335 = vld [vmem:[%s333 + $0x4] sm:$0xf]
        %s336 = smul.u32 %s330, 2
        %s337 = smul.addr %s336, 4
        %s338 = scalar_lea.vmem %s280, %s337 [#allocation2]
        %v339 = vld [vmem:[%s338] sm:$0xf]
        %v340 = vld [vmem:[%s338 + $0x4] sm:$0xf]
        %v341 = vld [vmem:[%s1] sm:$0xf]
        %v342 = vld [vmem:[%s1 + $0x4] sm:$0xf]
        %v343 = vld [vmem:[%s2] sm:$0x1]
        %v345 = vlaneseq
        %v346 = vshrl.u32 %v345, 7
        %v347 = vsub.s32 0, %v346
        %v348 = vrot.slane %v343, %v347
        %v362 = vunpack.c.l.b16 %v334
        %v363 = vunpack.c.l.b16 %v335
        %v364 = vunpack.c.l.b16 %v317
        %v365 = vunpack.c.l.b16 %v318
        %v366 = vunpack.c.l.b16 %v319
        %v367 = vunpack.c.l.b16 %v320
        %v368 = vunpack.c.l.b16 %v321
        %v369 = vunpack.c.l.b16 %v322
        %v370 = vunpack.c.l.b16 %v323
        %v371 = vunpack.c.l.b16 %v324
        %v372 = vunpack.c.l.b16 %v339
        %v373 = vunpack.c.l.b16 %v340
        %v374 = vpack.c.b16 %v363, %v362
        %v375 = vpack.c.b16 %v365, %v364
        %v376 = vpack.c.b16 %v367, %v366
        %v377 = vpack.c.b16 %v369, %v368
        %v378 = vpack.c.b16 %v371, %v370
        %v379 = vpack.c.b16 %v373, %v372
        %v382 = vunpack.c.l.b16 %v341
        %v383 = vunpack.c.l.b16 %v342
        %v384 = vpack.c.b16 %v383, %v382
        %vm386 = vcmask 130048
        %v388 = vsel %vm386, %v374, 0
        %v391 = vsel %vm386, %v375, 0
        %v394 = vsel %vm386, %v376, 0
        %v397 = vsel %vm386, %v377, 0
        %v400 = vsel %vm386, %v378, 0
        %v403 = vsel %vm386, %v379, 0
        %405 = vmatprep.subr.bf16.mxu0 0
        %406 = vmatpush1.bf16.msra.mxu0 %v384
        %407 = vmatprep.subr.bf16.mxu0 0
        %408 = vmatpush1.bf16.msra.mxu0 0
        %409 = vmatprep.subr.bf16.mxu0 0
        %410 = vmatpush1.bf16.msra.mxu0 0
        %411 = vmatprep.subr.bf16.mxu0 0
        %412 = vmatpush1.bf16.msra.mxu0 0
        %413 = vmatprep.subr.bf16.mxu0 0
        %414 = vmatpush1.bf16.msra.mxu0 0
        %415 = vmatprep.subr.bf16.mxu0 0
        %416 = vmatpush1.bf16.msra.mxu0 0
        %417 = vmatprep.subr.bf16.mxu0 0
        %418 = vmatpush1.bf16.msra.mxu0 0
        %419 = vmatprep.subr.bf16.mxu0 0
        %420 = vmatpush1.bf16.msra.mxu0 0
        %421 = vmatprep.subr.bf16.mxu0 0
        %422 = vmatpush1.bf16.msra.mxu0 0
        %423 = vmatprep.subr.bf16.mxu0 0
        %424 = vmatpush1.bf16.msra.mxu0 0
        %425 = vmatprep.subr.bf16.mxu0 0
        %426 = vmatpush1.bf16.msra.mxu0 0
        %427 = vmatprep.subr.bf16.mxu0 0
        %428 = vmatpush1.bf16.msra.mxu0 0
        %429 = vmatprep.subr.bf16.mxu0 0
        %430 = vmatpush1.bf16.msra.mxu0 0
        %431 = vmatprep.subr.bf16.mxu0 0
        %432 = vmatpush1.bf16.msra.mxu0 0
        %433 = vmatprep.subr.bf16.mxu0 0
        %434 = vmatpush1.bf16.msra.mxu0 0
        %435 = vmatprep.subr.bf16.mxu0 0
        %436 = vmatpush1.bf16.msra.mxu0 0
        %437 = vmatprep.mubr.bf16.mxu0 0
        %438 = vmatmul.mubr.bf16.gmra.mrb[0].mxu0 %v388
        %v439 = vpop.f32.mrb[0].mxu0
        %v440 = vadd.f32 %v348, %v439
        %v441 = vpop.f32.mrb[0].mxu0
        %v442 = vpop.f32.mrb[0].mxu0
        %v443 = vadd.f32 %v348, %v442
        %v444 = vpop.f32.mrb[0].mxu0
        %445 = vmatprep.mubr.bf16.mxu0 0
        %446 = vmatmul.mubr.bf16.gmra.mrb[0].mxu0 %v391
        %v447 = vpop.f32.mrb[0].mxu0
        %v448 = vadd.f32 %v348, %v447
        %v449 = vpop.f32.mrb[0].mxu0
        %v450 = vpop.f32.mrb[0].mxu0
        %v451 = vadd.f32 %v348, %v450
        %v452 = vpop.f32.mrb[0].mxu0
        %453 = vmatprep.mubr.bf16.mxu0 0
        %454 = vmatmul.mubr.bf16.gmra.mrb[0].mxu0 %v394
        %v455 = vpop.f32.mrb[0].mxu0
        %v456 = vadd.f32 %v348, %v455
        %v457 = vpop.f32.mrb[0].mxu0
        %v458 = vpop.f32.mrb[0].mxu0
        %v459 = vadd.f32 %v348, %v458
        %v460 = vpop.f32.mrb[0].mxu0
        %461 = vmatprep.mubr.bf16.mxu0 0
        %462 = vmatmul.mubr.bf16.gmra.mrb[0].mxu0 %v397
        %v463 = vpop.f32.mrb[0].mxu0
        %v464 = vadd.f32 %v348, %v463
        %v465 = vpop.f32.mrb[0].mxu0
        %v466 = vpop.f32.mrb[0].mxu0
        %v467 = vadd.f32 %v348, %v466
        %v468 = vpop.f32.mrb[0].mxu0
        %469 = vmatprep.mubr.bf16.mxu0 0
        %470 = vmatmul.mubr.bf16.gmra.mrb[0].mxu0 %v400
        %v471 = vpop.f32.mrb[0].mxu0
        %v472 = vadd.f32 %v348, %v471
        %v473 = vpop.f32.mrb[0].mxu0
        %v474 = vpop.f32.mrb[0].mxu0
        %v475 = vadd.f32 %v348, %v474
        %v476 = vpop.f32.mrb[0].mxu0
        %477 = vmatprep.mubr.bf16.mxu0 0
        %478 = vmatmul.mubr.bf16.gmra.mrb[0].mxu0 %v403
        %v479 = vpop.f32.mrb[0].mxu0
        %v480 = vadd.f32 %v348, %v479
        %v481 = vpop.f32.mrb[0].mxu0
        %v482 = vpop.f32.mrb[0].mxu0
        %v483 = vadd.f32 %v348, %v482
        %v484 = vpop.f32.mrb[0].mxu0
        %485 = vdwg.mxu0
        %v486 = vmax.f32 %v440, 0.0
        %v487 = vmax.f32 %v443, 0.0
        %v488 = vmax.f32 %v448, 0.0
        %v489 = vmax.f32 %v451, 0.0
        %v490 = vmax.f32 %v456, 0.0
        %v491 = vmax.f32 %v459, 0.0
        %v492 = vmax.f32 %v464, 0.0
        %v493 = vmax.f32 %v467, 0.0
        %v494 = vmax.f32 %v472, 0.0
        %v495 = vmax.f32 %v475, 0.0
        %v496 = vmax.f32 %v480, 0.0
        %v497 = vmax.f32 %v483, 0.0
        %p498 = scmp.gt.s32.totalorder %s29, 0
        %s499 = scalar_select %p498, 1, 0
        %v500 = vstv %s499
        %vm501 = vcmp.eq.s32.totalorder %v500, 1
        %p502 = scmp.lt.s32.totalorder %s29, 3
        %s503 = scalar_select %p502, 1, 0
        %v504 = vstv %s503
        %vm505 = vcmp.eq.s32.totalorder %v504, 1
        %v506 = vsel %vm501, 1, 0
        %v507 = vsel %vm505, 1, 0
        %vm508 = vcmp.eq.s32.totalorder %v506, 1
        %vm509 = vcmp.eq.s32.totalorder %v507, 1
        %v510 = vsel %vm508, %v486, 0.0
        %v511 = vsel %vm508, %v487, 0.0
        %v512 = vsel 1, %v488, 0.0
        %v513 = vsel 1, %v489, 0.0
        %v514 = vsel 1, %v490, 0.0
        %v515 = vsel 1, %v491, 0.0
        %v516 = vsel 1, %v492, 0.0
        %v517 = vsel 1, %v493, 0.0
        %v518 = vsel 1, %v494, 0.0
        %v519 = vsel 1, %v495, 0.0
        %v520 = vsel %vm509, %v496, 0.0
        %v521 = vsel %vm509, %v497, 0.0
        %v522 = vpack.c.bf16 %v511, %v510
        %v523 = vpack.c.bf16 %v513, %v512
        %v524 = vpack.c.bf16 %v515, %v514
        %v525 = vpack.c.bf16 %v517, %v516
        %v526 = vpack.c.bf16 %v519, %v518
        %v527 = vpack.c.bf16 %v521, %v520
        %v529 = vshrl.u32 %v522, 16
        %v531 = vrot.slane %v529, 7
        %v532 = vshll.u32 %v522, 16
        %v534 = vor.u32 %v531, %v532
        %v536 = vshrl.u32 %v523, 16
        %v538 = vrot.slane %v536, 7
        %v539 = vshll.u32 %v523, 16
        %v541 = vor.u32 %v538, %v539
        %v543 = vshrl.u32 %v524, 16
        %v545 = vrot.slane %v543, 7
        %v546 = vshll.u32 %v524, 16
        %v548 = vor.u32 %v545, %v546
        %v550 = vshrl.u32 %v525, 16
        %v552 = vrot.slane %v550, 7
        %v553 = vshll.u32 %v525, 16
        %v555 = vor.u32 %v552, %v553
        %v557 = vshrl.u32 %v526, 16
        %v559 = vrot.slane %v557, 7
        %v560 = vshll.u32 %v526, 16
        %v562 = vor.u32 %v559, %v560
        %v564 = vshrl.u32 %v527, 16
        %v566 = vrot.slane %v564, 7
        %v567 = vshll.u32 %v527, 16
        %v569 = vor.u32 %v566, %v567
        %vm576 = vcmask 1040384
        %vm577 = vsmask.f32 256
        %vm578 = vmand %vm576, %vm577
        %v579 = vsel %vm578, 0, %v534
        %v580 = vsel %vm578, 0, %v541
        %v581 = vsel %vm578, 0, %v548
        %v582 = vsel %vm578, 0, %v555
        %v583 = vsel %vm578, 0, %v562
        %v584 = vsel %vm578, 0, %v569
        %v585 = vrot.slane %v532, 1
        %v586 = vor.u32 %v529, %v585
        %v587 = vrot.slane %v539, 1
        %v588 = vor.u32 %v536, %v587
        %v589 = vrot.slane %v546, 1
        %v590 = vor.u32 %v543, %v589
        %v591 = vrot.slane %v553, 1
        %v592 = vor.u32 %v550, %v591
        %v593 = vrot.slane %v560, 1
        %v594 = vor.u32 %v557, %v593
        %v595 = vrot.slane %v567, 1
        %v596 = vor.u32 %v564, %v595
        %vm603 = vcmask 1047552
        %vm604 = vsmask.f32 7424
        %vm605 = vmand %vm603, %vm604
        %v606 = vsel %vm605, %v586, 0
        %v607 = vsel %vm605, %v588, 0
        %v608 = vsel %vm605, %v590, 0
        %v609 = vsel %vm605, %v592, 0
        %v610 = vsel %vm605, %v594, 0
        %v611 = vsel %vm605, %v596, 0
        %618 = vrot.lane.b32.xlu0 %v522, 4
        %v619 = vpop.permute.xlu0 %618
        %620 = vrot.lane.b32.xlu0 %v523, 4
        %v621 = vpop.permute.xlu0 %620
        %622 = vrot.lane.b32.xlu0 %v524, 4
        %v623 = vpop.permute.xlu0 %622
        %624 = vrot.lane.b32.xlu0 %v525, 4
        %v625 = vpop.permute.xlu0 %624
        %626 = vrot.lane.b32.xlu0 %v526, 4
        %v627 = vpop.permute.xlu0 %626
        %628 = vrot.lane.b32.xlu0 %v527, 4
        %v629 = vpop.permute.xlu0 %628
        %636 = vrot.lane.b32.xlu0 %v606, 8
        %v637 = vpop.permute.xlu0 %636
        %638 = vrot.lane.b32.xlu0 %v607, 8
        %v639 = vpop.permute.xlu0 %638
        %640 = vrot.lane.b32.xlu0 %v608, 8
        %v641 = vpop.permute.xlu0 %640
        %642 = vrot.lane.b32.xlu0 %v609, 8
        %v643 = vpop.permute.xlu0 %642
        %644 = vrot.lane.b32.xlu0 %v610, 8
        %v645 = vpop.permute.xlu0 %644
        %646 = vrot.lane.b32.xlu0 %v611, 8
        %v647 = vpop.permute.xlu0 %646
        %vm648 = vcmask 31744
        %v651 = vsel %vm648, %v579, %v619
        %v654 = vsel %vm648, %v580, %v621
        %v657 = vsel %vm648, %v581, %v623
        %v660 = vsel %vm648, %v582, %v625
        %v663 = vsel %vm648, %v583, %v627
        %v666 = vsel %vm648, %v584, %v629
        %vm667 = vcmask 64512
        %v669 = vsel %vm667, %v651, %v637
        %v671 = vsel %vm667, %v654, %v639
        %v673 = vsel %vm667, %v657, %v641
        %v675 = vsel %vm667, %v660, %v643
        %v677 = vsel %vm667, %v663, %v645
        %v679 = vsel %vm667, %v666, %v647
        %v680 = vld [vmem:[%s3] sm:$0xf]
        %v681 = vld [vmem:[%s3 + $0x4] sm:$0x3]
        %s682 = scalar_lea.vmem %s3, 8
        %v683 = vld [vmem:[%s682] sm:$0xf]
        %v684 = vld [vmem:[%s682 + $0x4] sm:$0x3]
        %v687 = vunpack.c.l.b16 %v683
        %v688 = vunpack.c.l.b16 %v684
        %v689 = vpack.c.b16 %v688, %v687
        %vm690 = vcmask 97280
        %v691 = vsel %vm690, %v671, 0
        %v693 = vsel %vm690, %v673, 0
        %v695 = vsel %vm690, %v675, 0
        %v697 = vsel %vm690, %v677, 0
        %vm699 = vcmask 1045504
        %v701 = vsel %vm699, %v689, 0
        %703 = vmatprep.subr.bf16.mxu0 0
        %704 = vmatpush1.bf16.msra.mxu0 %v701
        %705 = vmatprep.subr.bf16.mxu0 0
        %706 = vmatpush1.bf16.msra.mxu0 0
        %707 = vmatprep.subr.bf16.mxu0 0
        %708 = vmatpush1.bf16.msra.mxu0 0
        %709 = vmatprep.subr.bf16.mxu0 0
        %710 = vmatpush1.bf16.msra.mxu0 0
        %711 = vmatprep.subr.bf16.mxu0 0
        %712 = vmatpush1.bf16.msra.mxu0 0
        %713 = vmatprep.subr.bf16.mxu0 0
        %714 = vmatpush1.bf16.msra.mxu0 0
        %715 = vmatprep.subr.bf16.mxu0 0
        %716 = vmatpush1.bf16.msra.mxu0 0
        %717 = vmatprep.subr.bf16.mxu0 0
        %718 = vmatpush1.bf16.msra.mxu0 0
        %719 = vmatprep.subr.bf16.mxu0 0
        %720 = vmatpush1.bf16.msra.mxu0 0
        %721 = vmatprep.subr.bf16.mxu0 0
        %722 = vmatpush1.bf16.msra.mxu0 0
        %723 = vmatprep.subr.bf16.mxu0 0
        %724 = vmatpush1.bf16.msra.mxu0 0
        %725 = vmatprep.subr.bf16.mxu0 0
        %726 = vmatpush1.bf16.msra.mxu0 0
        %727 = vmatprep.subr.bf16.mxu0 0
        %728 = vmatpush1.bf16.msra.mxu0 0
        %729 = vmatprep.subr.bf16.mxu0 0
        %730 = vmatpush1.bf16.msra.mxu0 0
        %731 = vmatprep.subr.bf16.mxu0 0
        %732 = vmatpush1.bf16.msra.mxu0 0
        %733 = vmatprep.subr.bf16.mxu0 0
        %734 = vmatpush1.bf16.msra.mxu0 0
        %735 = vmatprep.mubr.bf16.mxu0 0
        %736 = vmatmul.mubr.bf16.gmra.mrb[0].mxu0 %v691
        %v737 = vpop.f32.mrb[0].mxu0
        %v738 = vadd.f32 0.0, %v737
        %v739 = vpop.f32.mrb[0].mxu0
        %v740 = vpop.f32.mrb[0].mxu0
        %v741 = vadd.f32 0.0, %v740
        %v742 = vpop.f32.mrb[0].mxu0
        %743 = vmatprep.mubr.bf16.mxu0 0
        %744 = vmatmul.mubr.bf16.gmra.mrb[0].mxu0 %v693
        %v745 = vpop.f32.mrb[0].mxu0
        %v746 = vadd.f32 0.0, %v745
        %v747 = vpop.f32.mrb[0].mxu0
        %v748 = vpop.f32.mrb[0].mxu0
        %v749 = vadd.f32 0.0, %v748
        %v750 = vpop.f32.mrb[0].mxu0
        %751 = vmatprep.mubr.bf16.mxu0 0
        %752 = vmatmul.mubr.bf16.gmra.mrb[0].mxu0 %v695
        %v753 = vpop.f32.mrb[0].mxu0
        %v754 = vadd.f32 0.0, %v753
        %v755 = vpop.f32.mrb[0].mxu0
        %v756 = vpop.f32.mrb[0].mxu0
        %v757 = vadd.f32 0.0, %v756
        %v758 = vpop.f32.mrb[0].mxu0
        %759 = vmatprep.mubr.bf16.mxu0 0
        %760 = vmatmul.mubr.bf16.gmra.mrb[0].mxu0 %v697
        %v761 = vpop.f32.mrb[0].mxu0
        %v762 = vadd.f32 0.0, %v761
        %v763 = vpop.f32.mrb[0].mxu0
        %v764 = vpop.f32.mrb[0].mxu0
        %v765 = vadd.f32 0.0, %v764
        %v766 = vpop.f32.mrb[0].mxu0
        %767 = vdwg.mxu0
        %v770 = vunpack.c.l.b16 %v680
        %v771 = vunpack.c.l.b16 %v681
        %v772 = vpack.c.b16 %v771, %v770
        %v773 = vsel %vm690, %v669, 0
        %v776 = vsel %vm699, %v772, 0
        %778 = vmatprep.subr.bf16.mxu0 0
        %779 = vmatpush1.bf16.msra.mxu0 %v776
        %780 = vmatprep.subr.bf16.mxu0 0
        %781 = vmatpush1.bf16.msra.mxu0 0
        %782 = vmatprep.subr.bf16.mxu0 0
        %783 = vmatpush1.bf16.msra.mxu0 0
        %784 = vmatprep.subr.bf16.mxu0 0
        %785 = vmatpush1.bf16.msra.mxu0 0
        %786 = vmatprep.subr.bf16.mxu0 0
        %787 = vmatpush1.bf16.msra.mxu0 0
        %788 = vmatprep.subr.bf16.mxu0 0
        %789 = vmatpush1.bf16.msra.mxu0 0
        %790 = vmatprep.subr.bf16.mxu0 0
        %791 = vmatpush1.bf16.msra.mxu0 0
        %792 = vmatprep.subr.bf16.mxu0 0
        %793 = vmatpush1.bf16.msra.mxu0 0
        %794 = vmatprep.subr.bf16.mxu0 0
        %795 = vmatpush1.bf16.msra.mxu0 0
        %796 = vmatprep.subr.bf16.mxu0 0
        %797 = vmatpush1.bf16.msra.mxu0 0
        %798 = vmatprep.subr.bf16.mxu0 0
        %799 = vmatpush1.bf16.msra.mxu0 0
        %800 = vmatprep.subr.bf16.mxu0 0
        %801 = vmatpush1.bf16.msra.mxu0 0
        %802 = vmatprep.subr.bf16.mxu0 0
        %803 = vmatpush1.bf16.msra.mxu0 0
        %804 = vmatprep.subr.bf16.mxu0 0
        %805 = vmatpush1.bf16.msra.mxu0 0
        %806 = vmatprep.subr.bf16.mxu0 0
        %807 = vmatpush1.bf16.msra.mxu0 0
        %808 = vmatprep.subr.bf16.mxu0 0
        %809 = vmatpush1.bf16.msra.mxu0 0
        %810 = vmatprep.mubr.bf16.mxu0 0
        %811 = vmatmul.mubr.bf16.gmra.mrb[0].mxu0 %v773
        %v812 = vpop.f32.mrb[0].mxu0
        %v813 = vadd.f32 %v738, %v812
        %v814 = vpop.f32.mrb[0].mxu0
        %v815 = vpop.f32.mrb[0].mxu0
        %v816 = vadd.f32 %v741, %v815
        %v817 = vpop.f32.mrb[0].mxu0
        %818 = vmatprep.mubr.bf16.mxu0 0
        %819 = vmatmul.mubr.bf16.gmra.mrb[0].mxu0 %v691
        %v820 = vpop.f32.mrb[0].mxu0
        %v821 = vadd.f32 %v746, %v820
        %v822 = vpop.f32.mrb[0].mxu0
        %v823 = vpop.f32.mrb[0].mxu0
        %v824 = vadd.f32 %v749, %v823
        %v825 = vpop.f32.mrb[0].mxu0
        %826 = vmatprep.mubr.bf16.mxu0 0
        %827 = vmatmul.mubr.bf16.gmra.mrb[0].mxu0 %v693
        %v828 = vpop.f32.mrb[0].mxu0
        %v829 = vadd.f32 %v754, %v828
        %v830 = vpop.f32.mrb[0].mxu0
        %v831 = vpop.f32.mrb[0].mxu0
        %v832 = vadd.f32 %v757, %v831
        %v833 = vpop.f32.mrb[0].mxu0
        %834 = vmatprep.mubr.bf16.mxu0 0
        %835 = vmatmul.mubr.bf16.gmra.mrb[0].mxu0 %v695
        %v836 = vpop.f32.mrb[0].mxu0
        %v837 = vadd.f32 %v762, %v836
        %v838 = vpop.f32.mrb[0].mxu0
        %v839 = vpop.f32.mrb[0].mxu0
        %v840 = vadd.f32 %v765, %v839
        %v841 = vpop.f32.mrb[0].mxu0
        %842 = vdwg.mxu0
        %s843 = scalar_lea.vmem %s3, 16
        %v844 = vld [vmem:[%s843] sm:$0xf]
        %v845 = vld [vmem:[%s843 + $0x4] sm:$0x3]
        %v848 = vunpack.c.l.b16 %v844
        %v849 = vunpack.c.l.b16 %v845
        %v850 = vpack.c.b16 %v849, %v848
        %v851 = vsel %vm690, %v679, 0
        %v854 = vsel %vm699, %v850, 0
        %856 = vmatprep.subr.bf16.mxu0 0
        %857 = vmatpush1.bf16.msra.mxu0 %v854
        %858 = vmatprep.subr.bf16.mxu0 0
        %859 = vmatpush1.bf16.msra.mxu0 0
        %860 = vmatprep.subr.bf16.mxu0 0
        %861 = vmatpush1.bf16.msra.mxu0 0
        %862 = vmatprep.subr.bf16.mxu0 0
        %863 = vmatpush1.bf16.msra.mxu0 0
        %864 = vmatprep.subr.bf16.mxu0 0
        %865 = vmatpush1.bf16.msra.mxu0 0
        %866 = vmatprep.subr.bf16.mxu0 0
        %867 = vmatpush1.bf16.msra.mxu0 0
        %868 = vmatprep.subr.bf16.mxu0 0
        %869 = vmatpush1.bf16.msra.mxu0 0
        %870 = vmatprep.subr.bf16.mxu0 0
        %871 = vmatpush1.bf16.msra.mxu0 0
        %872 = vmatprep.subr.bf16.mxu0 0
        %873 = vmatpush1.bf16.msra.mxu0 0
        %874 = vmatprep.subr.bf16.mxu0 0
        %875 = vmatpush1.bf16.msra.mxu0 0
        %876 = vmatprep.subr.bf16.mxu0 0
        %877 = vmatpush1.bf16.msra.mxu0 0
        %878 = vmatprep.subr.bf16.mxu0 0
        %879 = vmatpush1.bf16.msra.mxu0 0
        %880 = vmatprep.subr.bf16.mxu0 0
        %881 = vmatpush1.bf16.msra.mxu0 0
        %882 = vmatprep.subr.bf16.mxu0 0
        %883 = vmatpush1.bf16.msra.mxu0 0
        %884 = vmatprep.subr.bf16.mxu0 0
        %885 = vmatpush1.bf16.msra.mxu0 0
        %886 = vmatprep.subr.bf16.mxu0 0
        %887 = vmatpush1.bf16.msra.mxu0 0
        %888 = vmatprep.mubr.bf16.mxu0 0
        %889 = vmatmul.mubr.bf16.gmra.mrb[0].mxu0 %v693
        %v890 = vpop.f32.mrb[0].mxu0
        %v891 = vadd.f32 0.0, %v890
        %v892 = vpop.f32.mrb[0].mxu0
        %v893 = vpop.f32.mrb[0].mxu0
        %v894 = vadd.f32 0.0, %v893
        %v895 = vpop.f32.mrb[0].mxu0
        %896 = vmatprep.mubr.bf16.mxu0 0
        %897 = vmatmul.mubr.bf16.gmra.mrb[0].mxu0 %v695
        %v898 = vpop.f32.mrb[0].mxu0
        %v899 = vadd.f32 0.0, %v898
        %v900 = vpop.f32.mrb[0].mxu0
        %v901 = vpop.f32.mrb[0].mxu0
        %v902 = vadd.f32 0.0, %v901
        %v903 = vpop.f32.mrb[0].mxu0
        %904 = vmatprep.mubr.bf16.mxu0 0
        %905 = vmatmul.mubr.bf16.gmra.mrb[0].mxu0 %v697
        %v906 = vpop.f32.mrb[0].mxu0
        %v907 = vadd.f32 0.0, %v906
        %v908 = vpop.f32.mrb[0].mxu0
        %v909 = vpop.f32.mrb[0].mxu0
        %v910 = vadd.f32 0.0, %v909
        %v911 = vpop.f32.mrb[0].mxu0
        %912 = vmatprep.mubr.bf16.mxu0 0
        %913 = vmatmul.mubr.bf16.gmra.mrb[0].mxu0 %v851
        %v914 = vpop.f32.mrb[0].mxu0
        %v915 = vadd.f32 0.0, %v914
        %v916 = vpop.f32.mrb[0].mxu0
        %v917 = vpop.f32.mrb[0].mxu0
        %v918 = vadd.f32 0.0, %v917
        %v919 = vpop.f32.mrb[0].mxu0
        %920 = vdwg.mxu0
        %v921 = vadd.f32 %v813, %v891
        %v922 = vadd.f32 %v816, %v894
        %v923 = vadd.f32 %v821, %v899
        %v924 = vadd.f32 %v824, %v902
        %v925 = vadd.f32 %v829, %v907
        %v926 = vadd.f32 %v832, %v910
        %v927 = vadd.f32 %v837, %v915
        %v928 = vadd.f32 %v840, %v918
        %v929 = vld [vmem:[%s4] sm:$0x1]
        %v931 = vlaneseq
        %v932 = vshrl.u32 %v931, 7
        %v933 = vsub.s32 0, %v932
        %v934 = vrot.slane %v929, %v933
        %v936 = vadd.f32 %v921, %v934
        %v937 = vadd.f32 %v922, %v934
        %v938 = vadd.f32 %v923, %v934
        %v939 = vadd.f32 %v924, %v934
        %v940 = vadd.f32 %v925, %v934
        %v941 = vadd.f32 %v926, %v934
        %v942 = vadd.f32 %v927, %v934
        %v943 = vadd.f32 %v928, %v934
        %v944 = vmax.f32 %v936, 0.0
        %v945 = vmax.f32 %v937, 0.0
        %v946 = vmax.f32 %v938, 0.0
        %v947 = vmax.f32 %v939, 0.0
        %v948 = vmax.f32 %v940, 0.0
        %v949 = vmax.f32 %v941, 0.0
        %v950 = vmax.f32 %v942, 0.0
        %v951 = vmax.f32 %v943, 0.0
        %v952 = vpack.c.bf16 %v945, %v944
        %v953 = vpack.c.bf16 %v947, %v946
        %v954 = vpack.c.bf16 %v949, %v948
        %v955 = vpack.c.bf16 %v951, %v950
        %v956 = vld [vmem:[%s5] sm:$0x3]
        %v957 = vld [vmem:[%s6] sm:$0x1]
        %v959 = vlaneseq
        %v960 = vshrl.u32 %v959, 7
        %v961 = vsub.s32 0, %v960
        %v962 = vrot.slane %v957, %v961
        %v965 = vsel %vm648, %v952, 0
        %v968 = vsel %vm648, %v953, 0
        %v971 = vsel %vm648, %v954, 0
        %v974 = vsel %vm648, %v955, 0
        %vm976 = vcmask 1041408
        %v978 = vsel %vm976, %v956, 0
        %980 = vmatprep.subr.bf16.mxu0 0
        %981 = vmatpush1.bf16.msra.mxu0 %v978
        %982 = vmatprep.subr.bf16.mxu0 0
        %983 = vmatpush1.bf16.msra.mxu0 0
        %984 = vmatprep.subr.bf16.mxu0 0
        %985 = vmatpush1.bf16.msra.mxu0 0
        %986 = vmatprep.subr.bf16.mxu0 0
        %987 = vmatpush1.bf16.msra.mxu0 0
        %988 = vmatprep.subr.bf16.mxu0 0
        %989 = vmatpush1.bf16.msra.mxu0 0
        %990 = vmatprep.subr.bf16.mxu0 0
        %991 = vmatpush1.bf16.msra.mxu0 0
        %992 = vmatprep.subr.bf16.mxu0 0
        %993 = vmatpush1.bf16.msra.mxu0 0
        %994 = vmatprep.subr.bf16.mxu0 0
        %995 = vmatpush1.bf16.msra.mxu0 0
        %996 = vmatprep.subr.bf16.mxu0 0
        %997 = vmatpush1.bf16.msra.mxu0 0
        %998 = vmatprep.subr.bf16.mxu0 0
        %999 = vmatpush1.bf16.msra.mxu0 0
        %1000 = vmatprep.subr.bf16.mxu0 0
        %1001 = vmatpush1.bf16.msra.mxu0 0
        %1002 = vmatprep.subr.bf16.mxu0 0
        %1003 = vmatpush1.bf16.msra.mxu0 0
        %1004 = vmatprep.subr.bf16.mxu0 0
        %1005 = vmatpush1.bf16.msra.mxu0 0
        %1006 = vmatprep.subr.bf16.mxu0 0
        %1007 = vmatpush1.bf16.msra.mxu0 0
        %1008 = vmatprep.subr.bf16.mxu0 0
        %1009 = vmatpush1.bf16.msra.mxu0 0
        %1010 = vmatprep.subr.bf16.mxu0 0
        %1011 = vmatpush1.bf16.msra.mxu0 0
        %1012 = vmatprep.mubr.bf16.mxu0 0
        %1013 = vmatmul.mubr.bf16.gmra.mrb[0].mxu0 %v965
        %v1014 = vpop.f32.mrb[0].mxu0
        %v1015 = vadd.f32 %v962, %v1014
        %v1016 = vpop.f32.mrb[0].mxu0
        %v1017 = vpop.f32.mrb[0].mxu0
        %v1018 = vadd.f32 %v962, %v1017
        %v1019 = vpop.f32.mrb[0].mxu0
        %1020 = vmatprep.mubr.bf16.mxu0 0
        %1021 = vmatmul.mubr.bf16.gmra.mrb[0].mxu0 %v968
        %v1022 = vpop.f32.mrb[0].mxu0
        %v1023 = vadd.f32 %v962, %v1022
        %v1024 = vpop.f32.mrb[0].mxu0
        %v1025 = vpop.f32.mrb[0].mxu0
        %v1026 = vadd.f32 %v962, %v1025
        %v1027 = vpop.f32.mrb[0].mxu0
        %1028 = vmatprep.mubr.bf16.mxu0 0
        %1029 = vmatmul.mubr.bf16.gmra.mrb[0].mxu0 %v971
        %v1030 = vpop.f32.mrb[0].mxu0
        %v1031 = vadd.f32 %v962, %v1030
        %v1032 = vpop.f32.mrb[0].mxu0
        %v1033 = vpop.f32.mrb[0].mxu0
        %v1034 = vadd.f32 %v962, %v1033
        %v1035 = vpop.f32.mrb[0].mxu0
        %1036 = vmatprep.mubr.bf16.mxu0 0
        %1037 = vmatmul.mubr.bf16.gmra.mrb[0].mxu0 %v974
        %v1038 = vpop.f32.mrb[0].mxu0
        %v1039 = vadd.f32 %v962, %v1038
        %v1040 = vpop.f32.mrb[0].mxu0
        %v1041 = vpop.f32.mrb[0].mxu0
        %v1042 = vadd.f32 %v962, %v1041
        %v1043 = vpop.f32.mrb[0].mxu0
        %1044 = vdwg.mxu0
        %v1045 = vunpack.c.l.bf16 %v317
        %v1046 = vunpack.c.l.bf16 %v318
        %v1047 = vunpack.c.l.bf16 %v319
        %v1048 = vunpack.c.l.bf16 %v320
        %v1049 = vunpack.c.l.bf16 %v321
        %v1050 = vunpack.c.l.bf16 %v322
        %v1051 = vunpack.c.l.bf16 %v323
        %v1052 = vunpack.c.l.bf16 %v324
        %v1053 = vadd.f32 %v1015, %v1045
        %v1054 = vadd.f32 %v1018, %v1046
        %v1055 = vadd.f32 %v1023, %v1047
        %v1056 = vadd.f32 %v1026, %v1048
        %v1057 = vadd.f32 %v1031, %v1049
        %v1058 = vadd.f32 %v1034, %v1050
        %v1059 = vadd.f32 %v1039, %v1051
        %v1060 = vadd.f32 %v1042, %v1052
        %v1061 = vmax.f32 %v1053, 0.0
        %v1062 = vmax.f32 %v1054, 0.0
        %v1063 = vmax.f32 %v1055, 0.0
        %v1064 = vmax.f32 %v1056, 0.0
        %v1065 = vmax.f32 %v1057, 0.0
        %v1066 = vmax.f32 %v1058, 0.0
        %v1067 = vmax.f32 %v1059, 0.0
        %v1068 = vmax.f32 %v1060, 0.0
        %v1069 = vpack.c.bf16 %v1062, %v1061
        %v1070 = vpack.c.bf16 %v1064, %v1063
        %v1071 = vpack.c.bf16 %v1066, %v1065
        %v1072 = vpack.c.bf16 %v1068, %v1067
        %v1077 = vunpack.c.l.b16 %v1069
        %v1078 = vunpack.c.h.b16 %v1069
        %v1079 = vunpack.c.l.b16 %v1070
        %v1080 = vunpack.c.h.b16 %v1070
        %v1081 = vunpack.c.l.b16 %v1071
        %v1082 = vunpack.c.h.b16 %v1071
        %v1083 = vunpack.c.l.b16 %v1072
        %v1084 = vunpack.c.h.b16 %v1072
        %v1085 = vpack.c.b16 %v1077, %v1077
        %v1086 = vpack.c.b16 %v1078, %v1078
        %v1087 = vpack.c.b16 %v1079, %v1079
        %v1088 = vpack.c.b16 %v1080, %v1080
        %v1089 = vpack.c.b16 %v1081, %v1081
        %v1090 = vpack.c.b16 %v1082, %v1082
        %v1091 = vpack.c.b16 %v1083, %v1083
        %v1092 = vpack.c.b16 %v1084, %v1084
        %vm1101 = vcmask 125952
        %1102 = vst.msk [vmem:[%s310] sm:$0xf] %vm1101, %v1085
        %1103 = vst.msk [vmem:[%s310 + $0x4] sm:$0xf] %vm1101, %v1086
        %1104 = vst.msk [vmem:[%s310 + $0x8] sm:$0xf] %vm1101, %v1087
        %1105 = vst.msk [vmem:[%s310 + $0xc] sm:$0xf] %vm1101, %v1088
        %1106 = vst.msk [vmem:[%s310 + $0x10] sm:$0xf] %vm1101, %v1089
        %1107 = vst.msk [vmem:[%s310 + $0x14] sm:$0xf] %vm1101, %v1090
        %1108 = vst.msk [vmem:[%s310 + $0x18] sm:$0xf] %vm1101, %v1091
        %1109 = vst.msk [vmem:[%s310 + $0x1c] sm:$0xf] %vm1101, %v1092
        %s1110 = sand.u32 %s198, 1
        %s1111 = scalar_lea.sflag [#allocation4], %s1110
        %s1112 = sand.u32 %s198, 1
        %s1113 = smul.addr %s1112, 32
        %s1114 = scalar_lea.vmem [#allocation5], %s1113
        // Predicated region
        $region53: #{tpu_custom_call.1} parent=47 // pred_check
          %p1115 = pneg %p208
        $region54: #{tpu_custom_call.1} parent=47 // pred_check_branch
          %1117 = sbr.rel (%p1115) target = $region56
        $region55: #{tpu_custom_call.1} parent=47 // pred_region
          %s1118 = smul.u32 4, %s29
          %s1120 = ssub.s32 512, 512
          %1121 = vsyncadd %s1111, %s1120
          %s1122 = smul.addr %s1118, 2
          %s1123 = smul.addr %s28, 32
          %s1124 = sadd.s32 %s1122, %s1123
          %s1125 = smul.addr %s1124, 64
          %s1126 = scalar_lea.hbm %s7, %s1125
          %s1127 = sshll.u32 %s1114, 4
          %s1128 = int_to_ptr.vmem [resolvable:$true] %s1127
          %1133 = dma.vmem_to_hbm [thread:$0]  %s1128, 512, %s1126, %s1111, 64, 64, 4
        $region56: #{tpu_custom_call.1} parent=47 // pred_fallthru
          _
      $region48: #{tpu_custom_call.1} parent=5 // pred_fallthru
        _
      %p1134 = scmp.le.s32.totalorder 2, %s19
      // Predicated region
      $region57: #{tpu_custom_call.1} parent=5 // pred_check
        %p1135 = pneg %p1134
      $region58: #{tpu_custom_call.1} parent=5 // pred_check_branch
        %1137 = sbr.rel (%p1135) target = $region60
      $region59: #{tpu_custom_call.1} parent=5 // pred_region
        %s1138 = ssub.s32 %s19, 2
        // Predicated region
        $region61: #{tpu_custom_call.1} parent=59 // pred_check
          %p1139 = pneg %p214
        $region62: #{tpu_custom_call.1} parent=59 // pred_check_branch
          %1141 = sbr.rel (%p1139) target = $region64
        $region63: #{tpu_custom_call.1} parent=59 // pred_region
          %s1142 = sand.u32 %s199, 1
          %s1143 = scalar_lea.sflag [#allocation4], %s1142
          %s1144 = sand.u32 %s199, 1
          %s1145 = smul.addr %s1144, 32
          %s1146 = scalar_lea.vmem [#allocation5], %s1145
          %1147 = dma.done %s1143, 512
        $region64: #{tpu_custom_call.1} parent=59 // pred_fallthru
          _
      $region60: #{tpu_custom_call.1} parent=5 // pred_fallthru
        _
    $region6: #{tpu_custom_call.1} parent=1 // loop_footer
      %s23 = sadd.s32 1, %s19
    $region7: #{tpu_custom_call.1} parent=1 // loop_footer_branch
      %18 = sbr.rel target = $region3
    $region8: #{tpu_custom_call.1} parent=1 // loop_exit
      _
    %1148 = vsyncpa [#allocation3], 1
    %s1149 = scalar_lea.sflag [#allocation3], 1
    %1150 = vsyncpa %s1149, 1
    %1151 = vsyncpa [#allocation4], 1
    %s1152 = scalar_lea.sflag [#allocation4], 1
    %1153 = vsyncpa %s1152, 1

</llo_original>
